<compile_context>
chip_gen: v6e
topology: v6e:2x2x1
jax: 0.10.0
libtpu: 0.0.40
codegen_flags: <defaults>
</compile_context>

<pallas_src>
import jax
import jax.numpy as jnp
from jax.experimental import pallas as pl
from jax.experimental.pallas import tpu as pltpu


def _round_up(x, m):
    return (x + m - 1) // m * m


def _noise_to_feat_kernel(x_ref, w_ref, bias_ref, scale_ref, shift_ref, o_ref):
    # In-kernel cast of the f32 noise tile to bf16 (VPU has slack); f32 MXU
    # accumulation via preferred_element_type.
    x = x_ref[...].astype(jnp.bfloat16)
    h = jnp.dot(x, w_ref[...], preferred_element_type=jnp.float32)
    # + per-channel bias (spatial broadcast baked into the flat (1, C*16)
    #   vector), ReLU, then eval-mode BN folded into a single affine. All f32.
    h = jnp.maximum(h + bias_ref[...], 0.0)
    o_ref[...] = (h * scale_ref[...] + shift_ref[...]).astype(o_ref.dtype)


def prepare_params(lin_w, bias, bn_gamma, bn_beta, bn_mean, bn_var, eps=1e-5):
    """One-time (hoisted) parameter preprocessing: transpose/cast/BN folding."""
    cf, _noise = lin_w.shape              # lin_w: (out_channels*16, noise_size)
    c = cf // 16
    inv = bn_gamma.reshape(c).astype(jnp.float32) * jax.lax.rsqrt(
        bn_var.reshape(c).astype(jnp.float32) + eps)
    return {
        # (noise_size, C*16), bf16 operand for the MXU
        "w_t": lin_w.T.astype(jnp.bfloat16),
        # per-channel vectors expanded to the flat feature axis (f -> f // 16)
        "bias": jnp.repeat(bias.reshape(c).astype(jnp.float32), 16).reshape(1, cf),
        "bn_scale": jnp.repeat(inv, 16).reshape(1, cf),
        "bn_shift": jnp.repeat(
            bn_beta.reshape(c).astype(jnp.float32)
            - bn_mean.reshape(c).astype(jnp.float32) * inv, 16).reshape(1, cf),
    }


def _batch_tile(n, noise, cf, out_bytes, block_n):
    """Pick the batch tile (rows per grid step).

    Prefers (in order): a tile that divides N exactly (no pad / no slice),
    at least 2 grid programs when N >= 32 (v7x megacore), and a double-
    buffered working set that fits a ~12 MiB VMEM budget.
    """
    budget = 12 << 20
    fixed = 2 * noise * cf * 2                       # double-buffered bf16 weight
    per_row = 2 * (noise * 4 + cf * out_bytes)       # double-buffered x + out rows
    rows = (budget - fixed) // per_row
    cap_mem = max(16, min(block_n, rows // 16 * 16))
    cap = cap_mem
    if n >= 32:   # keep >= 2 programs so v7x can split the batch over both TCs
        cap = min(cap, _round_up((n + 1) // 2, 16))
    if n <= cap:
        return n                                     # one full-array block
    for t in range(cap - cap % 16, 15, -16):         # largest divisor tile
        if n % t == 0:
            return t
    if n <= cap_mem:
        return n                                     # one block beats a pad pass
    return cap                                       # fallback: pad last block


def wgan_noise_to_2d_feat(x, params, *, block_n=1024, out_dtype=jnp.float32):
    """x: (N, noise_size) -> (N, out_channels, 4, 4)."""
    n, noise = x.shape
    cf = params["w_t"].shape[1]
    c = cf // 16
    out_bytes = jnp.dtype(out_dtype).itemsize

    tb = _batch_tile(n, noise, cf, out_bytes, block_n)
    pad = (-n) % tb
    x_run = jnp.pad(x, ((0, pad), (0, 0))) if pad else x
    n_run = n + pad

    out_flat = pl.pallas_call(
        _noise_to_feat_kernel,
        out_shape=jax.ShapeDtypeStruct((n_run, cf), out_dtype),
        grid=(n_run // tb,),
        in_specs=[
            pl.BlockSpec((tb, noise), lambda i: (i, 0)),   # batch tile of noise
            pl.BlockSpec((noise, cf), lambda i: (0, 0)),   # weight, resident
            pl.BlockSpec((1, cf), lambda i: (0, 0)),       # bias, resident
            pl.BlockSpec((1, cf), lambda i: (0, 0)),       # BN scale, resident
            pl.BlockSpec((1, cf), lambda i: (0, 0)),       # BN shift, resident
        ],
        out_specs=pl.BlockSpec((tb, cf), lambda i: (i, 0)),
        compiler_params=pltpu.CompilerParams(
            dimension_semantics=("parallel",),
            vmem_limit_bytes=32 * 1024 * 1024),
    )(x_run, params["w_t"], params["bias"], params["bn_scale"], params["bn_shift"])

    if pad:
        out_flat = out_flat[:n]
    return out_flat.reshape(n, c, 4, 4)


def _reference(x, lin_w, bias, gamma, beta, mean, var, eps=1e-5, cast_bf16=False):
    """Pure-JAX reference mirroring the PyTorch module (eval-mode BN)."""
    n = x.shape[0]
    c = lin_w.shape[0] // 16
    if cast_bf16:  # mirror the kernel's bf16 matmul operands
        x = x.astype(jnp.bfloat16).astype(jnp.float32)
        lin_w = lin_w.astype(jnp.bfloat16).astype(jnp.float32)
    h = x @ lin_w.T                                           # (N, C*16)
    h = h.reshape(n, c, 4, 4) + bias.reshape(1, c, 1, 1)
    h = jnp.maximum(h, 0.0)
    inv = (gamma / jnp.sqrt(var + eps)).reshape(1, c, 1, 1)
    return (h - mean.reshape(1, c, 1, 1)) * inv + beta.reshape(1, c, 1, 1)


if __name__ == "__main__":
    key = jax.random.PRNGKey(0)
    k_x, k_x2, k_w, k_b, k_g, k_bt, k_m, k_v = jax.random.split(key, 8)

    NOISE, C = 128, 32                       # output channels -> (N, 32, 4, 4)

    lin_w = jax.random.normal(k_w, (C * 16, NOISE), jnp.float32)   # init: normal(0, 1)
    # Module init sets bias=0 and BN to identity; use non-trivial values so the
    # bias / BN path is actually exercised by the correctness check.
    bias = 0.1 * jax.random.normal(k_b, (1, C, 1, 1), jnp.float32)
    bn_gamma = 1.0 + 0.1 * jax.random.normal(k_g, (C,), jnp.float32)
    bn_beta = 0.1 * jax.random.normal(k_bt, (C,), jnp.float32)
    bn_mean = 0.1 * jax.random.normal(k_m, (C,), jnp.float32)
    bn_var = jnp.abs(1.0 + 0.1 * jax.random.normal(k_v, (C,), jnp.float32))
    params = prepare_params(lin_w, bias, bn_gamma, bn_beta, bn_mean, bn_var)

    # --- Case 1: tiny batch (single full-array block, no padding) -----------
    N = 2
    x = jax.random.normal(k_x, (N, NOISE), jnp.float32)
    out = jax.block_until_ready(wgan_noise_to_2d_feat(x, params))
    assert out.shape == (N, C, 4, 4)
    ref_bf16 = _reference(x, lin_w, bias, bn_gamma, bn_beta, bn_mean, bn_var,
                          cast_bf16=True)
    ref_f32 = _reference(x, lin_w, bias, bn_gamma, bn_beta, bn_mean, bn_var,
                         cast_bf16=False)
    assert jnp.allclose(out, ref_bf16, atol=2e-3, rtol=2e-3)
    assert jnp.allclose(out, ref_f32, atol=0.5, rtol=0.1)

    # --- Case 2: multi-block batch (grid > 1, batch axis "parallel") --------
    N2 = 48
    x2 = jax.random.normal(k_x2, (N2, NOISE), jnp.float32)
    out2 = jax.block_until_ready(wgan_noise_to_2d_feat(x2, params))
    assert out2.shape == (N2, C, 4, 4)
    ref2_bf16 = _reference(x2, lin_w, bias, bn_gamma, bn_beta, bn_mean, bn_var,
                           cast_bf16=True)
    assert jnp.allclose(out2, ref2_bf16, atol=2e-3, rtol=2e-3)

    # --- Case 3: opt-in bf16 output (halves HBM writeback) ------------------
    out_bf16 = jax.block_until_ready(
        wgan_noise_to_2d_feat(x, params, out_dtype=jnp.bfloat16))
    assert out_bf16.dtype == jnp.bfloat16
    assert jnp.allclose(out_bf16.astype(jnp.float32), ref_bf16,
                        atol=0.25, rtol=0.02)

    print("KERNEL_OK")
</pallas_src>

<mosaic_0001>
module attributes {stable_mosaic.version = 11 : i64} {
  func.func @_noise_to_feat_kernel(%arg0: i32, %arg1: memref<2x128xf32, #tpu.memory_space<vmem>>, %arg2: memref<128x512xbf16, #tpu.memory_space<vmem>>, %arg3: memref<1x512xf32, #tpu.memory_space<vmem>>, %arg4: memref<1x512xf32, #tpu.memory_space<vmem>>, %arg5: memref<1x512xf32, #tpu.memory_space<vmem>>, %arg6: memref<2x512xf32, #tpu.memory_space<vmem>>) attributes {dimension_semantics = [#tpu.dimension_semantics<parallel>], iteration_bounds = array<i64: 1>, scalar_prefetch = 0 : i64, scratch_operands = 0 : i64, tpu.core_type = #tpu.core_type<tc>, window_params = [{transform_indices = @transform_0, window_bounds = array<i64: 2, 128>}, {pipeline_mode = #tpu.pipeline_mode<synchronous>, transform_indices = @transform_1, window_bounds = array<i64: 128, 512>}, {pipeline_mode = #tpu.pipeline_mode<synchronous>, transform_indices = @transform_2, window_bounds = array<i64: 1, 512>}, {pipeline_mode = #tpu.pipeline_mode<synchronous>, transform_indices = @transform_3, window_bounds = array<i64: 1, 512>}, {pipeline_mode = #tpu.pipeline_mode<synchronous>, transform_indices = @transform_4, window_bounds = array<i64: 1, 512>}, {transform_indices = @transform_5, window_bounds = array<i64: 2, 512>}]} {
    %c0 = arith.constant 0 : index
    %c0_0 = arith.constant 0 : index
    %0 = vector.load %arg1[%c0, %c0_0] : memref<2x128xf32, #tpu.memory_space<vmem>>, vector<2x128xf32>
    %1 = arith.truncf %0 : vector<2x128xf32> to vector<2x128xbf16>
    %c0_1 = arith.constant 0 : index
    %c0_2 = arith.constant 0 : index
    %2 = vector.load %arg2[%c0_1, %c0_2] : memref<128x512xbf16, #tpu.memory_space<vmem>>, vector<128x512xbf16>
    %cst = arith.constant dense<0.000000e+00> : vector<2x512xf32>
    %3 = tpu.matmul %1, %2, %cst {dimension_numbers = #tpu.dot_dimension_numbers<[1], [0], [0], [1], [0, 0, 1, 1], [], []>} : vector<2x128xbf16>, vector<128x512xbf16>, vector<2x512xf32> -> vector<2x512xf32>
    %c0_3 = arith.constant 0 : index
    %c0_4 = arith.constant 0 : index
    %4 = vector.load %arg3[%c0_3, %c0_4] : memref<1x512xf32, #tpu.memory_space<vmem>>, vector<1x512xf32>
    %5 = vector.broadcast %4 : vector<1x512xf32> to vector<2x512xf32>
    %6 = arith.addf %3, %5 : vector<2x512xf32>
    %cst_5 = arith.constant 0.000000e+00 : f32
    %7 = vector.broadcast %cst_5 : f32 to vector<2x512xf32>
    %8 = arith.maximumf %6, %7 : vector<2x512xf32>
    %c0_6 = arith.constant 0 : index
    %c0_7 = arith.constant 0 : index
    %9 = vector.load %arg4[%c0_6, %c0_7] : memref<1x512xf32, #tpu.memory_space<vmem>>, vector<1x512xf32>
    %10 = vector.broadcast %9 : vector<1x512xf32> to vector<2x512xf32>
    %11 = arith.mulf %8, %10 : vector<2x512xf32>
    %c0_8 = arith.constant 0 : index
    %c0_9 = arith.constant 0 : index
    %12 = vector.load %arg5[%c0_8, %c0_9] : memref<1x512xf32, #tpu.memory_space<vmem>>, vector<1x512xf32>
    %13 = vector.broadcast %12 : vector<1x512xf32> to vector<2x512xf32>
    %14 = arith.addf %11, %13 : vector<2x512xf32>
    %c0_10 = arith.constant 0 : index
    %c0_11 = arith.constant 0 : index
    %15 = vector.load %arg6[%c0_10, %c0_11] : memref<2x512xf32, #tpu.memory_space<vmem>>, vector<2x512xf32>
    tpu.vector_store %arg6[%c0_10, %c0_11], %14 {strides = array<i32>} : memref<2x512xf32, #tpu.memory_space<vmem>>, vector<2x512xf32>,
    return
  }
  func.func @transform_0(%arg0: i32) -> (i32, i32) {
    %c0_i32 = arith.constant 0 : i32
    %c0_i32_0 = arith.constant 0 : i32
    return %arg0, %c0_i32 : i32, i32
  }
  func.func @transform_1(%arg0: i32) -> (i32, i32) {
    %c0_i32 = arith.constant 0 : i32
    %c0_i32_0 = arith.constant 0 : i32
    %c0_i32_1 = arith.constant 0 : i32
    return %c0_i32, %c0_i32_0 : i32, i32
  }
  func.func @transform_2(%arg0: i32) -> (i32, i32) {
    %c0_i32 = arith.constant 0 : i32
    %c0_i32_0 = arith.constant 0 : i32
    %c0_i32_1 = arith.constant 0 : i32
    return %c0_i32, %c0_i32_0 : i32, i32
  }
  func.func @transform_3(%arg0: i32) -> (i32, i32) {
    %c0_i32 = arith.constant 0 : i32
    %c0_i32_0 = arith.constant 0 : i32
    %c0_i32_1 = arith.constant 0 : i32
    return %c0_i32, %c0_i32_0 : i32, i32
  }
  func.func @transform_4(%arg0: i32) -> (i32, i32) {
    %c0_i32 = arith.constant 0 : i32
    %c0_i32_0 = arith.constant 0 : i32
    %c0_i32_1 = arith.constant 0 : i32
    return %c0_i32, %c0_i32_0 : i32, i32
  }
  func.func @transform_5(%arg0: i32) -> (i32, i32) {
    %c0_i32 = arith.constant 0 : i32
    %c0_i32_0 = arith.constant 0 : i32
    return %arg0, %c0_i32 : i32, i32
  }
}

</mosaic_0001>

<llo_original>
// kernel: tpu_custom_call.1
$region0: #{tpu_custom_call.1}
  #allocation0 [shape = 'u32[]', space=smem, size = 0x4, offset = 0x4, fixed_abs, tag = 'smem constant byte address 0x4 - core index']
  #allocation1 [shape = 'u32[144,128]{1,0:T(1,128)}', space=vmem, size = 0x12000, scoped, tag = 'internal scratch']
  %s0 = inlined_call_operand.hbm [shape: f32[2,128], index: 0, kind: input, shape index: {}]
  %s1 = inlined_call_operand.hbm [shape: bf16[128,512], index: 1, kind: input, shape index: {}]
  %s2 = inlined_call_operand.hbm [shape: f32[1,512], index: 2, kind: input, shape index: {}]
  %s3 = inlined_call_operand.vmem [shape: f32[1,512], index: 3, kind: input, shape index: {}]
  %s4 = inlined_call_operand.hbm [shape: f32[1,512], index: 4, kind: input, shape index: {}]
  %s5 = inlined_call_operand.hbm [shape: f32[2,512], index: 5, kind: output, shape index: {}]
  %s6 = sld [smem:[#allocation0]]
  $region46: #{tpu_custom_call.1} parent=0
    _
  %s8 = ssub.s32 1, %s6
  %s9 = scalar_select 0, %s8, %s6
  $region1: #{tpu_custom_call.1} parent=0
    #allocation2 [shape = 'u8[1024]{0}', space=vmem, size = 0x400, scoped, tag = 'input window, operand 0, single buffered']
    #allocation3 [shape = 's32[1]{0}', space=sflag, size = 0x4, scoped, tag = 'scoped memory for tpu_custom_call.1']
    #allocation4 [shape = 's32[1]{0}', space=sflag, size = 0x4, scoped, tag = 'scoped memory for tpu_custom_call.1']
    #allocation5 [shape = 'u8[131072]{0}', space=vmem, size = 0x20000, scoped, tag = 'input window, operand 1, single buffered']
    #allocation6 [shape = 's32[1]{0}', space=sflag, size = 0x4, scoped, tag = 'scoped memory for tpu_custom_call.1']
    #allocation7 [shape = 'u8[2048]{0}', space=vmem, size = 0x800, scoped, tag = 'input window, operand 2, single buffered']
    #allocation8 [shape = 'u8[2048]{0}', space=vmem, size = 0x800, scoped, tag = 'input window, operand 4, single buffered']
    #allocation9 [shape = 's32[1]{0}', space=sflag, size = 0x4, scoped, tag = 'scoped memory for tpu_custom_call.1']
    #allocation10 [shape = 'u8[4096]{0}', space=vmem, size = 0x1000, scoped, tag = 'output window, operand 0, single buffered']
    %10 = vsyncpa [#allocation3], 0
    %11 = vsyncpa [#allocation6], 0
    %12 = vsyncpa [#allocation9], 0
    %13 = vsyncpa [#allocation4], 0
    // Predicated region
    $region2: #{tpu_custom_call.1} parent=1 // pred_check
      _
    $region3: #{tpu_custom_call.1} parent=1 // pred_check_branch
      %15 = sbr.rel (0) target = $region5
    $region4: #{tpu_custom_call.1} parent=1 // pred_region
      %s17 = ssub.s32 32, 32
      %18 = vsyncadd [#allocation3], %s17
      %s20 = sshll.u32 [#allocation2], 4
      %s21 = int_to_ptr.vmem [resolvable:$true] %s20
      %23 = dma.hbm_to_vmem [thread:$0]  %s0, 32, %s21, [#allocation3]
    $region5: #{tpu_custom_call.1} parent=1 // pred_fallthru
      _
    // Predicated region
    $region6: #{tpu_custom_call.1} parent=1 // pred_check
      _
    $region7: #{tpu_custom_call.1} parent=1 // pred_check_branch
      %25 = sbr.rel (0) target = $region9
    $region8: #{tpu_custom_call.1} parent=1 // pred_region
      %s27 = ssub.s32 4096, 4096
      %28 = vsyncadd [#allocation6], %s27
      %s29 = sshll.u32 [#allocation5], 4
      %s30 = int_to_ptr.vmem [resolvable:$true] %s29
      %35 = dma.hbm_to_vmem [thread:$0]  %s1, 4096, %s30, [#allocation6], 256, 256, 16
    $region9: #{tpu_custom_call.1} parent=1 // pred_fallthru
      _
    // Predicated region
    $region10: #{tpu_custom_call.1} parent=1 // pred_check
      _
    $region11: #{tpu_custom_call.1} parent=1 // pred_check_branch
      %37 = sbr.rel (0) target = $region13
    $region12: #{tpu_custom_call.1} parent=1 // pred_region
      %s39 = ssub.s32 64, 64
      %40 = vsyncadd [#allocation6], %s39
      %s42 = sshll.u32 [#allocation7], 4
      %s43 = int_to_ptr.vmem [resolvable:$true] %s42
      %45 = dma.hbm_to_vmem [thread:$0]  %s2, 64, %s43, [#allocation6]
    $region13: #{tpu_custom_call.1} parent=1 // pred_fallthru
      _
    // Predicated region
    $region14: #{tpu_custom_call.1} parent=1 // pred_check
      _
    $region15: #{tpu_custom_call.1} parent=1 // pred_check_branch
      %47 = sbr.rel (0) target = $region17
    $region16: #{tpu_custom_call.1} parent=1 // pred_region
      _
    $region17: #{tpu_custom_call.1} parent=1 // pred_fallthru
      _
    // Predicated region
    $region18: #{tpu_custom_call.1} parent=1 // pred_check
      _
    $region19: #{tpu_custom_call.1} parent=1 // pred_check_branch
      %49 = sbr.rel (0) target = $region21
    $region20: #{tpu_custom_call.1} parent=1 // pred_region
      %s51 = ssub.s32 64, 64
      %52 = vsyncadd [#allocation9], %s51
      %s54 = sshll.u32 [#allocation8], 4
      %s55 = int_to_ptr.vmem [resolvable:$true] %s54
      %57 = dma.hbm_to_vmem [thread:$0]  %s4, 64, %s55, [#allocation9]
    $region21: #{tpu_custom_call.1} parent=1 // pred_fallthru
      _
    // Predicated region
    $region22: #{tpu_custom_call.1} parent=1 // pred_check
      _
    $region23: #{tpu_custom_call.1} parent=1 // pred_check_branch
      %59 = sbr.rel (0) target = $region25
    $region24: #{tpu_custom_call.1} parent=1 // pred_region
      %60 = dma.done [#allocation3], 32
    $region25: #{tpu_custom_call.1} parent=1 // pred_fallthru
      _
    // Predicated region
    $region26: #{tpu_custom_call.1} parent=1 // pred_check
      _
    $region27: #{tpu_custom_call.1} parent=1 // pred_check_branch
      %62 = sbr.rel (0) target = $region29
    $region28: #{tpu_custom_call.1} parent=1 // pred_region
      %63 = dma.done [#allocation6], 4096
    $region29: #{tpu_custom_call.1} parent=1 // pred_fallthru
      _
    // Predicated region
    $region30: #{tpu_custom_call.1} parent=1 // pred_check
      _
    $region31: #{tpu_custom_call.1} parent=1 // pred_check_branch
      %65 = sbr.rel (0) target = $region33
    $region32: #{tpu_custom_call.1} parent=1 // pred_region
      %66 = dma.done [#allocation6], 64
    $region33: #{tpu_custom_call.1} parent=1 // pred_fallthru
      _
    // Predicated region
    $region34: #{tpu_custom_call.1} parent=1 // pred_check
      _
    $region35: #{tpu_custom_call.1} parent=1 // pred_check_branch
      %68 = sbr.rel (0) target = $region37
    $region36: #{tpu_custom_call.1} parent=1 // pred_region
      %69 = dma.done [#allocation9], 64
    $region37: #{tpu_custom_call.1} parent=1 // pred_fallthru
      _
    %v71 = vld [vmem:[#allocation2] sm:$0x3]
    %v72 = vpack.c.bf16 %v71, %v71
    %v73 = vld [vmem:[#allocation5] sm:$0xff]
    %v74 = vld [vmem:[#allocation5 + $0x8] sm:$0xff]
    %v75 = vld [vmem:[#allocation5 + $0x10] sm:$0xff]
    %v76 = vld [vmem:[#allocation5 + $0x18] sm:$0xff]
    %v77 = vld [vmem:[#allocation5 + $0x20] sm:$0xff]
    %v78 = vld [vmem:[#allocation5 + $0x28] sm:$0xff]
    %v79 = vld [vmem:[#allocation5 + $0x30] sm:$0xff]
    %v80 = vld [vmem:[#allocation5 + $0x38] sm:$0xff]
    %v81 = vld [vmem:[#allocation5 + $0x40] sm:$0xff]
    %v82 = vld [vmem:[#allocation5 + $0x48] sm:$0xff]
    %v83 = vld [vmem:[#allocation5 + $0x50] sm:$0xff]
    %v84 = vld [vmem:[#allocation5 + $0x58] sm:$0xff]
    %v85 = vld [vmem:[#allocation5 + $0x60] sm:$0xff]
    %v86 = vld [vmem:[#allocation5 + $0x68] sm:$0xff]
    %v87 = vld [vmem:[#allocation5 + $0x70] sm:$0xff]
    %v88 = vld [vmem:[#allocation5 + $0x78] sm:$0xff]
    %v89 = vld [vmem:[#allocation5 + $0x80] sm:$0xff]
    %v90 = vld [vmem:[#allocation5 + $0x88] sm:$0xff]
    %v91 = vld [vmem:[#allocation5 + $0x90] sm:$0xff]
    %v92 = vld [vmem:[#allocation5 + $0x98] sm:$0xff]
    %v93 = vld [vmem:[#allocation5 + $0xa0] sm:$0xff]
    %v94 = vld [vmem:[#allocation5 + $0xa8] sm:$0xff]
    %v95 = vld [vmem:[#allocation5 + $0xb0] sm:$0xff]
    %v96 = vld [vmem:[#allocation5 + $0xb8] sm:$0xff]
    %v97 = vld [vmem:[#allocation5 + $0xc0] sm:$0xff]
    %v98 = vld [vmem:[#allocation5 + $0xc8] sm:$0xff]
    %v99 = vld [vmem:[#allocation5 + $0xd0] sm:$0xff]
    %v100 = vld [vmem:[#allocation5 + $0xd8] sm:$0xff]
    %v101 = vld [vmem:[#allocation5 + $0xe0] sm:$0xff]
    %v102 = vld [vmem:[#allocation5 + $0xe8] sm:$0xff]
    %v103 = vld [vmem:[#allocation5 + $0xf0] sm:$0xff]
    %v104 = vld [vmem:[#allocation5 + $0xf8] sm:$0xff]
    %v105 = vld [vmem:[#allocation7] sm:$0xf]
    %v107 = vlaneseq
    %v108 = vshrl.u32 %v107, 7
    %v109 = vsub.s32 0, %v108
    %v110 = vrot.slane %v105, %v109
    %v111 = vlaneseq
    %v112 = vshrl.u32 %v111, 7
    %v113 = vsub.s32 1, %v112
    %v114 = vrot.slane %v105, %v113
    %v115 = vlaneseq
    %v116 = vshrl.u32 %v115, 7
    %v117 = vsub.s32 2, %v116
    %v118 = vrot.slane %v105, %v117
    %v119 = vlaneseq
    %v120 = vshrl.u32 %v119, 7
    %v121 = vsub.s32 3, %v120
    %v122 = vrot.slane %v105, %v121
    %v159 = vunpack.c.l.b16 %v73
    %v160 = vunpack.c.h.b16 %v73
    %v161 = vunpack.c.l.b16 %v74
    %v162 = vunpack.c.h.b16 %v74
    %v163 = vunpack.c.l.b16 %v75
    %v164 = vunpack.c.h.b16 %v75
    %v165 = vunpack.c.l.b16 %v76
    %v166 = vunpack.c.h.b16 %v76
    %v167 = vunpack.c.l.b16 %v77
    %v168 = vunpack.c.h.b16 %v77
    %v169 = vunpack.c.l.b16 %v78
    %v170 = vunpack.c.h.b16 %v78
    %v171 = vunpack.c.l.b16 %v79
    %v172 = vunpack.c.h.b16 %v79
    %v173 = vunpack.c.l.b16 %v80
    %v174 = vunpack.c.h.b16 %v80
    %v175 = vunpack.c.l.b16 %v81
    %v176 = vunpack.c.h.b16 %v81
    %v177 = vunpack.c.l.b16 %v82
    %v178 = vunpack.c.h.b16 %v82
    %v179 = vunpack.c.l.b16 %v83
    %v180 = vunpack.c.h.b16 %v83
    %v181 = vunpack.c.l.b16 %v84
    %v182 = vunpack.c.h.b16 %v84
    %v183 = vunpack.c.l.b16 %v85
    %v184 = vunpack.c.h.b16 %v85
    %v185 = vunpack.c.l.b16 %v86
    %v186 = vunpack.c.h.b16 %v86
    %v187 = vunpack.c.l.b16 %v87
    %v188 = vunpack.c.h.b16 %v87
    %v189 = vunpack.c.l.b16 %v88
    %v190 = vunpack.c.h.b16 %v88
    %v191 = vunpack.c.l.b16 %v89
    %v192 = vunpack.c.h.b16 %v89
    %v193 = vunpack.c.l.b16 %v90
    %v194 = vunpack.c.h.b16 %v90
    %v195 = vunpack.c.l.b16 %v91
    %v196 = vunpack.c.h.b16 %v91
    %v197 = vunpack.c.l.b16 %v92
    %v198 = vunpack.c.h.b16 %v92
    %v199 = vunpack.c.l.b16 %v93
    %v200 = vunpack.c.h.b16 %v93
    %v201 = vunpack.c.l.b16 %v94
    %v202 = vunpack.c.h.b16 %v94
    %v203 = vunpack.c.l.b16 %v95
    %v204 = vunpack.c.h.b16 %v95
    %v205 = vunpack.c.l.b16 %v96
    %v206 = vunpack.c.h.b16 %v96
    %v207 = vunpack.c.l.b16 %v97
    %v208 = vunpack.c.h.b16 %v97
    %v209 = vunpack.c.l.b16 %v98
    %v210 = vunpack.c.h.b16 %v98
    %v211 = vunpack.c.l.b16 %v99
    %v212 = vunpack.c.h.b16 %v99
    %v213 = vunpack.c.l.b16 %v100
    %v214 = vunpack.c.h.b16 %v100
    %v215 = vunpack.c.l.b16 %v101
    %v216 = vunpack.c.h.b16 %v101
    %v217 = vunpack.c.l.b16 %v102
    %v218 = vunpack.c.h.b16 %v102
    %v219 = vunpack.c.l.b16 %v103
    %v220 = vunpack.c.h.b16 %v103
    %v221 = vunpack.c.l.b16 %v104
    %v222 = vunpack.c.h.b16 %v104
    %v223 = vpack.c.b16 %v163, %v159
    %v224 = vpack.c.b16 %v164, %v160
    %v225 = vpack.c.b16 %v165, %v161
    %v226 = vpack.c.b16 %v166, %v162
    %v227 = vpack.c.b16 %v171, %v167
    %v228 = vpack.c.b16 %v172, %v168
    %v229 = vpack.c.b16 %v173, %v169
    %v230 = vpack.c.b16 %v174, %v170
    %v231 = vpack.c.b16 %v179, %v175
    %v232 = vpack.c.b16 %v180, %v176
    %v233 = vpack.c.b16 %v181, %v177
    %v234 = vpack.c.b16 %v182, %v178
    %v235 = vpack.c.b16 %v187, %v183
    %v236 = vpack.c.b16 %v188, %v184
    %v237 = vpack.c.b16 %v189, %v185
    %v238 = vpack.c.b16 %v190, %v186
    %v239 = vpack.c.b16 %v195, %v191
    %v240 = vpack.c.b16 %v196, %v192
    %v241 = vpack.c.b16 %v197, %v193
    %v242 = vpack.c.b16 %v198, %v194
    %v243 = vpack.c.b16 %v203, %v199
    %v244 = vpack.c.b16 %v204, %v200
    %v245 = vpack.c.b16 %v205, %v201
    %v246 = vpack.c.b16 %v206, %v202
    %v247 = vpack.c.b16 %v211, %v207
    %v248 = vpack.c.b16 %v212, %v208
    %v249 = vpack.c.b16 %v213, %v209
    %v250 = vpack.c.b16 %v214, %v210
    %v251 = vpack.c.b16 %v219, %v215
    %v252 = vpack.c.b16 %v220, %v216
    %v253 = vpack.c.b16 %v221, %v217
    %v254 = vpack.c.b16 %v222, %v218
    %287 = vmatprep.subr.bf16.mxu0 %v252
    %288 = vmatpush1.bf16.msra.mxu0 %v251
    %289 = vmatprep.subr.bf16.mxu0 %v248
    %290 = vmatpush1.bf16.msra.mxu0 %v247
    %291 = vmatprep.subr.bf16.mxu0 %v244
    %292 = vmatpush1.bf16.msra.mxu0 %v243
    %293 = vmatprep.subr.bf16.mxu0 %v240
    %294 = vmatpush1.bf16.msra.mxu0 %v239
    %295 = vmatprep.subr.bf16.mxu0 %v236
    %296 = vmatpush1.bf16.msra.mxu0 %v235
    %297 = vmatprep.subr.bf16.mxu0 %v232
    %298 = vmatpush1.bf16.msra.mxu0 %v231
    %299 = vmatprep.subr.bf16.mxu0 %v228
    %300 = vmatpush1.bf16.msra.mxu0 %v227
    %301 = vmatprep.subr.bf16.mxu0 %v224
    %302 = vmatpush1.bf16.msra.mxu0 %v223
    %303 = vmatprep.subr.bf16.mxu0 0
    %304 = vmatpush2.bf16.msra.mxu0 0
    %305 = vmatprep.subr.bf16.mxu0 0
    %306 = vmatpush2.bf16.msra.mxu0 0
    %307 = vmatprep.subr.bf16.mxu0 0
    %308 = vmatpush2.bf16.msra.mxu0 0
    %309 = vmatprep.subr.bf16.mxu0 0
    %310 = vmatpush2.bf16.msra.mxu0 0
    %311 = vmatprep.subr.bf16.mxu0 0
    %312 = vmatpush2.bf16.msra.mxu0 0
    %313 = vmatprep.subr.bf16.mxu0 0
    %314 = vmatpush2.bf16.msra.mxu0 0
    %315 = vmatprep.subr.bf16.mxu0 0
    %316 = vmatpush2.bf16.msra.mxu0 0
    %317 = vmatprep.subr.bf16.mxu0 0
    %318 = vmatpush2.bf16.msra.mxu0 0
    %319 = vmatprep.mubr.bf16.mxu0 0
    %320 = vmatmul.mubr.bf16.gmra.mxu0 %v72
    %v321 = vpop.f32.mrf.mxu0
    %v322 = vadd.f32 %v110, %v321
    %v323 = vpop.f32.mrf.mxu0
    %v324 = vadd.f32 %v114, %v323
    %v325 = vpop.f32.mrf.mxu0
    %v326 = vpop.f32.mrf.mxu0
    %327 = vdwg.mxu0
    %328 = vmatprep.subr.bf16.mxu0 %v254
    %329 = vmatpush1.bf16.msra.mxu0 %v253
    %330 = vmatprep.subr.bf16.mxu0 %v250
    %331 = vmatpush1.bf16.msra.mxu0 %v249
    %332 = vmatprep.subr.bf16.mxu0 %v246
    %333 = vmatpush1.bf16.msra.mxu0 %v245
    %334 = vmatprep.subr.bf16.mxu0 %v242
    %335 = vmatpush1.bf16.msra.mxu0 %v241
    %336 = vmatprep.subr.bf16.mxu0 %v238
    %337 = vmatpush1.bf16.msra.mxu0 %v237
    %338 = vmatprep.subr.bf16.mxu0 %v234
    %339 = vmatpush1.bf16.msra.mxu0 %v233
    %340 = vmatprep.subr.bf16.mxu0 %v230
    %341 = vmatpush1.bf16.msra.mxu0 %v229
    %342 = vmatprep.subr.bf16.mxu0 %v226
    %343 = vmatpush1.bf16.msra.mxu0 %v225
    %344 = vmatprep.subr.bf16.mxu0 0
    %345 = vmatpush2.bf16.msra.mxu0 0
    %346 = vmatprep.subr.bf16.mxu0 0
    %347 = vmatpush2.bf16.msra.mxu0 0
    %348 = vmatprep.subr.bf16.mxu0 0
    %349 = vmatpush2.bf16.msra.mxu0 0
    %350 = vmatprep.subr.bf16.mxu0 0
    %351 = vmatpush2.bf16.msra.mxu0 0
    %352 = vmatprep.subr.bf16.mxu0 0
    %353 = vmatpush2.bf16.msra.mxu0 0
    %354 = vmatprep.subr.bf16.mxu0 0
    %355 = vmatpush2.bf16.msra.mxu0 0
    %356 = vmatprep.subr.bf16.mxu0 0
    %357 = vmatpush2.bf16.msra.mxu0 0
    %358 = vmatprep.subr.bf16.mxu0 0
    %359 = vmatpush2.bf16.msra.mxu0 0
    %360 = vmatprep.mubr.bf16.mxu0 0
    %361 = vmatmul.mubr.bf16.gmra.mxu0 %v72
    %v362 = vpop.f32.mrf.mxu0
    %v363 = vadd.f32 %v118, %v362
    %v364 = vpop.f32.mrf.mxu0
    %v365 = vadd.f32 %v122, %v364
    %v366 = vpop.f32.mrf.mxu0
    %v367 = vpop.f32.mrf.mxu0
    %368 = vdwg.mxu0
    %v369 = vmax.f32 %v322, 0.0
    %v370 = vmax.f32 %v324, 0.0
    %v371 = vmax.f32 %v363, 0.0
    %v372 = vmax.f32 %v365, 0.0
    %v373 = vld [vmem:[%s3] sm:$0xf]
    %v375 = vlaneseq
    %v376 = vshrl.u32 %v375, 7
    %v377 = vsub.s32 0, %v376
    %v378 = vrot.slane %v373, %v377
    %v379 = vlaneseq
    %v380 = vshrl.u32 %v379, 7
    %v381 = vsub.s32 1, %v380
    %v382 = vrot.slane %v373, %v381
    %v383 = vlaneseq
    %v384 = vshrl.u32 %v383, 7
    %v385 = vsub.s32 2, %v384
    %v386 = vrot.slane %v373, %v385
    %v387 = vlaneseq
    %v388 = vshrl.u32 %v387, 7
    %v389 = vsub.s32 3, %v388
    %v390 = vrot.slane %v373, %v389
    %v395 = vmul.f32 %v369, %v378
    %v396 = vmul.f32 %v370, %v382
    %v397 = vmul.f32 %v371, %v386
    %v398 = vmul.f32 %v372, %v390
    %v399 = vld [vmem:[#allocation8] sm:$0xf]
    %v401 = vlaneseq
    %v402 = vshrl.u32 %v401, 7
    %v403 = vsub.s32 0, %v402
    %v404 = vrot.slane %v399, %v403
    %v405 = vlaneseq
    %v406 = vshrl.u32 %v405, 7
    %v407 = vsub.s32 1, %v406
    %v408 = vrot.slane %v399, %v407
    %v409 = vlaneseq
    %v410 = vshrl.u32 %v409, 7
    %v411 = vsub.s32 2, %v410
    %v412 = vrot.slane %v399, %v411
    %v413 = vlaneseq
    %v414 = vshrl.u32 %v413, 7
    %v415 = vsub.s32 3, %v414
    %v416 = vrot.slane %v399, %v415
    %v421 = vadd.f32 %v395, %v404
    %v422 = vadd.f32 %v396, %v408
    %v423 = vadd.f32 %v397, %v412
    %v424 = vadd.f32 %v398, %v416
    %v429 = vcombine.low %v421, %v422
    %v430 = vcombine.low %v423, %v424
    %v432 = vunpack.c.l.s4 1983009808
    %v433 = vunpack.c.0.s8 %v432
    %v434 = vlaneseq
    %v435 = vshrl.u32 %v434, 7
    %v436 = vsub.s32 %v433, %v435
    %v437 = vrot.slane %v429, %v436
    %v439 = vunpack.c.l.s4 1983009808
    %v440 = vunpack.c.0.s8 %v439
    %v441 = vlaneseq
    %v442 = vshrl.u32 %v441, 7
    %v443 = vsub.s32 %v440, %v442
    %v444 = vrot.slane %v430, %v443
    %v445 = vcombine.low %v437, %v444
    %447 = vst [vmem:[#allocation10] sm:$0xff] %v445
    // Predicated region
    $region38: #{tpu_custom_call.1} parent=1 // pred_check
      _
    $region39: #{tpu_custom_call.1} parent=1 // pred_check_branch
      %449 = sbr.rel (0) target = $region41
    $region40: #{tpu_custom_call.1} parent=1 // pred_region
      %s451 = ssub.s32 128, 128
      %452 = vsyncadd [#allocation4], %s451
      %s454 = sshll.u32 [#allocation10], 4
      %s455 = int_to_ptr.vmem [resolvable:$true] %s454
      %457 = dma.vmem_to_hbm [thread:$0]  %s455, 128, %s5, [#allocation4]
    $region41: #{tpu_custom_call.1} parent=1 // pred_fallthru
      _
    // Predicated region
    $region42: #{tpu_custom_call.1} parent=1 // pred_check
      _
    $region43: #{tpu_custom_call.1} parent=1 // pred_check_branch
      %459 = sbr.rel (0) target = $region45
    $region44: #{tpu_custom_call.1} parent=1 // pred_region
      %460 = dma.done [#allocation4], 128
    $region45: #{tpu_custom_call.1} parent=1 // pred_fallthru
      _
    %461 = vsyncpa [#allocation3], 1
    %462 = vsyncpa [#allocation6], 1
    %463 = vsyncpa [#allocation9], 1
    %464 = vsyncpa [#allocation4], 1

</llo_original>
